<compile_context>
chip_gen: v5e
topology: v5e:2x2
jax: 0.10.0
libtpu: 0.0.40
codegen_flags: <defaults>
</compile_context>

<pallas_src>
import math

import jax
import jax.numpy as jnp
from jax.experimental import pallas as pl
from jax.experimental.pallas import tpu as pltpu


def _add_shape_kernel(shape_row_ref, x_ref, o_ref):
    # shape_row_ref: (1, W) row holding the (tiled) shape vector.
    # x_ref / o_ref: (TM, W) streaming tile of the input / output.
    # Pure VPU elementwise add; the (1, W) row broadcasts over the sublane axis.
    o_ref[...] = x_ref[...] + shape_row_ref[...]


def flatten_model_forward(x: jax.Array) -> jax.Array:
    """Pallas equivalent of FlattenModel.forward: x + tensor(x.shape)."""
    orig_shape = x.shape
    ndim = x.ndim
    n = orig_shape[-1]
    if n != ndim:
        raise ValueError(
            "FlattenModel's broadcast (input + flatten(shape)) requires "
            f"input.shape[-1] == input.ndim, got shape {orig_shape}")

    # torch.tensor(input.shape) is int64; adding to a float tensor promotes to
    # the float dtype.  Shape values are small integers -> exact in f32/bf16.
    sizes = jnp.asarray(orig_shape, dtype=x.dtype)

    total = math.prod(orig_shape)
    itemsize = x.dtype.itemsize

    # ---- choose a 2-D working layout (rows, width) -------------------------
    # width must be a multiple of n so the per-row addend is just `sizes`
    # repeated width//n times.  Prefer a lane-dense width (multiple of 128);
    # the reshape is free (contiguous row-major), so no extra HBM pass.
    lane_dense_w = (n * 128) // math.gcd(n, 128)          # lcm(n, 128)
    if total % lane_dense_w == 0 and lane_dense_w <= 4096:
        width = lane_dense_w
        # Widen (still dividing the total) to reduce per-step overhead.
        while width * 2 <= 2048 and total % (width * 2) == 0:
            width *= 2
    else:
        # Tiny / ragged case (e.g. the 24-element ONNX fixture): keep (M, n).
        width = n
    rows = total // width
    reps = width // n

    x2 = x.reshape(rows, width)
    addend = jnp.tile(sizes, reps).reshape(1, width)

    # ---- row tiling: big enough to pipeline, small enough for VMEM ---------
    if rows <= 512:
        tm = rows                         # full dim -> no (8,128) constraint
    else:
        # ~2 MiB per input tile; in+out double-buffered ~8 MiB, safe on v7x.
        budget_rows = max(8, ((2 << 20) // (width * itemsize)) // 8 * 8)
        tm = min(512, budget_rows)        # multiple of 8
    grid = (pl.cdiv(rows, tm),)

    out2 = pl.pallas_call(
        _add_shape_kernel,
        out_shape=jax.ShapeDtypeStruct((rows, width), x.dtype),
        grid_spec=pltpu.PrefetchScalarGridSpec(
            num_scalar_prefetch=0,
            grid=grid,
            in_specs=[
                # Tiny addend row: same block every step (effectively resident).
                pl.BlockSpec((1, width), lambda i: (0, 0)),
                # Streaming input tiles: double-buffered by the Pallas pipeline.
                pl.BlockSpec((tm, width), lambda i: (i, 0)),
            ],
            out_specs=pl.BlockSpec((tm, width), lambda i: (i, 0)),
        ),
        compiler_params=pltpu.CompilerParams(
            # Tiles are independent -> megacore sharding on v7x (harmless on
            # v5e/v6e).
            dimension_semantics=("parallel",),
        ),
    )(addend, x2)

    return out2.reshape(orig_shape)


if __name__ == "__main__":
    key = jax.random.PRNGKey(0)

    # Same shape as the ONNX test fixture: x = torch.randn(1, 2, 3, 4).
    x = jax.random.normal(key, (1, 2, 3, 4), dtype=jnp.float32)
    out = jax.block_until_ready(flatten_model_forward(x))
    ref = x + jnp.asarray(x.shape, dtype=x.dtype)
    assert out.shape == x.shape and out.dtype == x.dtype
    assert jnp.allclose(out, ref), "mismatch vs reference (small input)"

    # Second small case that exercises the lane-dense / tiled path
    # (total elements divisible by 128, shape[-1] == ndim still holds).
    key2 = jax.random.PRNGKey(0)
    x2 = jax.random.normal(key2, (2, 4, 16, 4), dtype=jnp.float32)
    out2 = jax.block_until_ready(flatten_model_forward(x2))
    ref2 = x2 + jnp.asarray(x2.shape, dtype=x2.dtype)
    assert out2.shape == x2.shape and out2.dtype == x2.dtype
    assert jnp.allclose(out2, ref2), "mismatch vs reference (lane-dense input)"

    print("KERNEL_OK")
</pallas_src>

<mosaic_0001>
module attributes {stable_mosaic.version = 11 : i64} {
  func.func @_add_shape_kernel(%arg0: i32, %arg1: memref<1x4xf32, #tpu.memory_space<vmem>>, %arg2: memref<6x4xf32, #tpu.memory_space<vmem>>, %arg3: memref<6x4xf32, #tpu.memory_space<vmem>>) attributes {dimension_semantics = [#tpu.dimension_semantics<parallel>], iteration_bounds = array<i64: 1>, scalar_prefetch = 0 : i64, scratch_operands = 0 : i64, tpu.core_type = #tpu.core_type<tc>, window_params = [{pipeline_mode = #tpu.pipeline_mode<synchronous>, transform_indices = @transform_0, window_bounds = array<i64: 1, 4>}, {transform_indices = @transform_1, window_bounds = array<i64: 6, 4>}, {transform_indices = @transform_2, window_bounds = array<i64: 6, 4>}]} {
    %c0 = arith.constant 0 : index
    %c0_0 = arith.constant 0 : index
    %0 = vector.load %arg2[%c0, %c0_0] : memref<6x4xf32, #tpu.memory_space<vmem>>, vector<6x4xf32>
    %c0_1 = arith.constant 0 : index
    %c0_2 = arith.constant 0 : index
    %1 = vector.load %arg1[%c0_1, %c0_2] : memref<1x4xf32, #tpu.memory_space<vmem>>, vector<1x4xf32>
    %2 = vector.broadcast %1 : vector<1x4xf32> to vector<6x4xf32>
    %3 = arith.addf %0, %2 : vector<6x4xf32>
    %c0_3 = arith.constant 0 : index
    %c0_4 = arith.constant 0 : index
    %4 = vector.load %arg3[%c0_3, %c0_4] : memref<6x4xf32, #tpu.memory_space<vmem>>, vector<6x4xf32>
    tpu.vector_store %arg3[%c0_3, %c0_4], %3 {strides = array<i32>} : memref<6x4xf32, #tpu.memory_space<vmem>>, vector<6x4xf32>,
    return
  }
  func.func @transform_0(%arg0: i32) -> (i32, i32) {
    %c0_i32 = arith.constant 0 : i32
    %c0_i32_0 = arith.constant 0 : i32
    %c0_i32_1 = arith.constant 0 : i32
    return %c0_i32, %c0_i32_0 : i32, i32
  }
  func.func @transform_1(%arg0: i32) -> (i32, i32) {
    %c0_i32 = arith.constant 0 : i32
    %c0_i32_0 = arith.constant 0 : i32
    return %arg0, %c0_i32 : i32, i32
  }
  func.func @transform_2(%arg0: i32) -> (i32, i32) {
    %c0_i32 = arith.constant 0 : i32
    %c0_i32_0 = arith.constant 0 : i32
    return %arg0, %c0_i32 : i32, i32
  }
}

</mosaic_0001>

<llo_original>
// kernel: tpu_custom_call.1
$region0: #{tpu_custom_call.1}
  #allocation0 [shape = 'u32[]', space=smem, size = 0x4, offset = 0x4, fixed_abs, tag = 'smem constant byte address 0x4 - core index']
  #allocation1 [shape = 'u32[72,128]{1,0:T(1,128)}', space=vmem, size = 0x9000, scoped, tag = 'internal scratch']
  %s0 = inlined_call_operand.vmem [shape: f32[1,4], index: 0, kind: input, shape index: {}]
  %s1 = inlined_call_operand.vmem [shape: f32[6,4], index: 1, kind: input, shape index: {}]
  %s2 = inlined_call_operand.vmem [shape: f32[6,4], index: 2, kind: output, shape index: {}]
  %s3 = sld [smem:[#allocation0]]
  $region18: #{tpu_custom_call.1} parent=0
    _
  %s5 = ssub.s32 1, %s3
  %s6 = scalar_select 0, %s5, %s3
  // Predicated region
  $region2: #{tpu_custom_call.1} parent=0 // pred_check
    _
  $region3: #{tpu_custom_call.1} parent=0 // pred_check_branch
    %8 = sbr.rel (0) target = $region5
  $region4: #{tpu_custom_call.1} parent=0 // pred_region
    _
  $region5: #{tpu_custom_call.1} parent=0 // pred_fallthru
    _
  // Predicated region
  $region6: #{tpu_custom_call.1} parent=0 // pred_check
    _
  $region7: #{tpu_custom_call.1} parent=0 // pred_check_branch
    %10 = sbr.rel (0) target = $region9
  $region8: #{tpu_custom_call.1} parent=0 // pred_region
    _
  $region9: #{tpu_custom_call.1} parent=0 // pred_fallthru
    _
  %v11 = vld [vmem:[%s1] sm:$0x3f]
  %v12 = vld [vmem:[%s0] sm:$0x1]
  %v14 = vperm.slane %v12, 0
  %v16 = vadd.f32 %v11, %v14
  %vm17 = vcmask 29696
  %18 = vst.msk [vmem:[%s2] sm:$0x3f] %vm17, %v16
  // Predicated region
  $region10: #{tpu_custom_call.1} parent=0 // pred_check
    _
  $region11: #{tpu_custom_call.1} parent=0 // pred_check_branch
    %20 = sbr.rel (0) target = $region13
  $region12: #{tpu_custom_call.1} parent=0 // pred_region
    _
  $region13: #{tpu_custom_call.1} parent=0 // pred_fallthru
    _
  // Predicated region
  $region14: #{tpu_custom_call.1} parent=0 // pred_check
    _
  $region15: #{tpu_custom_call.1} parent=0 // pred_check_branch
    %22 = sbr.rel (0) target = $region17
  $region16: #{tpu_custom_call.1} parent=0 // pred_region
    _
  $region17: #{tpu_custom_call.1} parent=0 // pred_fallthru
    _

</llo_original>
